<compile_context>
chip_gen: v5e
topology: v5e:2x2
jax: 0.10.0
libtpu: 0.0.40
codegen_flags: <defaults>
</compile_context>

<pallas_src>
import jax
import jax.numpy as jnp
import numpy as np
from jax.experimental import pallas as pl
from jax.experimental.pallas import tpu as pltpu


def _cdiv(a, b):
    return -(-a // b)


def _vmem_capacity_bytes():
    try:
        return int(pltpu.get_tpu_info().vmem_capacity_bytes)
    except Exception:
        return 64 * 1024 * 1024            # conservative (v7x-sized) fallback


def _choose_tiling(length, row_align, pair_bytes_per_elem, pipeline_budget_bytes):
    """Pick (lanes, rows, row_tile): minimal padding first, then widest lanes / biggest tile.

    pipeline_budget_bytes bounds 2 (double-buffer) x (pred block + target block).
    """
    max_block_elems = max(row_align * 128,
                          pipeline_budget_bytes // (2 * pair_bytes_per_elem))
    best = None
    for lanes in (512, 256, 128):
        rows = _cdiv(length, lanes)
        rows = _cdiv(rows, row_align) * row_align
        max_rows = max(row_align, (max_block_elems // lanes) // row_align * row_align)
        if rows <= max_rows:
            row_tile = rows                                  # single row-block per (n, c)
        else:
            row_tile, padded_rows = row_align, None
            for rt in range(max_rows, row_align - 1, -row_align):
                padded = _cdiv(rows, rt) * rt
                if padded_rows is None or padded < padded_rows:
                    row_tile, padded_rows = rt, padded
                if padded == rows:                           # exact fit, largest such tile
                    break
            rows = padded_rows
        pad_elems = rows * lanes - length
        key = (pad_elems, -lanes, -row_tile)
        if best is None or key < best[0]:
            best = (key, lanes, rows, row_tile)
    _, lanes, rows, row_tile = best
    return lanes, rows, row_tile


def _make_eldice_kernel(smooth, row_tile, lanes):
    groups = row_tile // 8

    def kernel(pred_ref, tgt_ref, out_ref, acc_it, acc_pp, acc_tt):
        r = pl.program_id(1)

        @pl.when(r == 0)
        def _():
            acc_it[...] = jnp.zeros_like(acc_it)
            acc_pp[...] = jnp.zeros_like(acc_pp)
            acc_tt[...] = jnp.zeros_like(acc_tt)

        # Steady state: stream native-dtype blocks, accumulate in f32 into vreg-scale
        # (8, lanes) accumulators.  The sublane-group fold is pure VALU adds
        # (no cross-lane XLU work, no block-sized accumulator stores).
        p = pred_ref[...].astype(jnp.float32).reshape(groups, 8, lanes)
        t = tgt_ref[...].astype(jnp.float32).reshape(groups, 8, lanes)
        acc_it[...] += jnp.sum(p * t, axis=0)
        acc_pp[...] += jnp.sum(p * p, axis=0)
        acc_tt[...] += jnp.sum(t * t, axis=0)

        # Single cross-lane/sublane reduction only in the epilogue.
        @pl.when(r == pl.num_programs(1) - 1)
        def _():
            inter = jnp.sum(acc_it[...])
            p2 = jnp.sum(acc_pp[...])
            t2 = jnp.sum(acc_tt[...])
            dice = 2.0 * inter / (p2 + t2 + smooth)
            out_ref[...] = jnp.broadcast_to(dice, out_ref.shape).astype(out_ref.dtype)

    return kernel


def eldice_loss(pred, target):
    """pred, target: (N, C, *spatial) -> scalar f32, matching PyTorch ELDiceLoss."""
    smooth = 1.0
    N, C = pred.shape[0], pred.shape[1]
    NC = N * C
    L = int(np.prod(pred.shape[2:]))

    p_bytes = np.dtype(pred.dtype).itemsize
    t_bytes = np.dtype(target.dtype).itemsize
    row_align = {4: 8, 2: 16, 1: 32}.get(min(p_bytes, t_bytes), 8)

    vmem_cap = _vmem_capacity_bytes()
    if vmem_cap >= 100 * 1024 * 1024:                 # v5e / v6e: 128 MiB physical VMEM
        pipeline_budget, vmem_limit = 64 * 1024 * 1024, 80 * 1024 * 1024
    else:                                             # v7x: 64 MiB per TensorCore
        pipeline_budget, vmem_limit = 32 * 1024 * 1024, 48 * 1024 * 1024

    lanes, rows, row_tile = _choose_tiling(L, row_align, p_bytes + t_bytes, pipeline_budget)
    L_pad = rows * lanes

    def _prep(x):
        x2d = x.reshape(NC, L)                        # row-major flatten (no copy)
        if L_pad != L:
            # Fallback only when the volume does not tile cleanly; zeros contribute
            # nothing to the sums and adaptive `lanes` keeps this pad small.
            x2d = jnp.pad(x2d, ((0, 0), (0, L_pad - L)))
        return x2d.reshape(NC, rows, lanes)           # keep native dtype (no host upcast)

    pred_b = _prep(pred)
    tgt_b = _prep(target)

    kernel = _make_eldice_kernel(smooth, row_tile, lanes)

    grid_spec = pltpu.PrefetchScalarGridSpec(
        num_scalar_prefetch=0,
        grid=(NC, rows // row_tile),
        in_specs=[
            pl.BlockSpec((1, row_tile, lanes), lambda i, r: (i, r, 0)),
            pl.BlockSpec((1, row_tile, lanes), lambda i, r: (i, r, 0)),
        ],
        out_specs=pl.BlockSpec((1, 1, 128), lambda i, r: (i, 0, 0)),
        scratch_shapes=[
            pltpu.VMEM((8, lanes), jnp.float32),
            pltpu.VMEM((8, lanes), jnp.float32),
            pltpu.VMEM((8, lanes), jnp.float32),
        ],
    )

    def _run(nc_axis_semantics):
        return jax.block_until_ready(
            pl.pallas_call(
                kernel,
                out_shape=jax.ShapeDtypeStruct((NC, 1, 128), jnp.float32),
                grid_spec=grid_spec,
                compiler_params=pltpu.CompilerParams(
                    dimension_semantics=(nc_axis_semantics, pltpu.ARBITRARY),
                    vmem_limit_bytes=vmem_limit,
                ),
            )(pred_b, tgt_b)
        )

    # On v7x (2 TensorCores / chip) split the NC axis across cores so both TCs stream
    # HBM; each (n, c) reduction chain stays on one core so correctness is preserved.
    device_kind = ""
    try:
        device_kind = jax.devices()[0].device_kind.lower()
    except Exception:
        pass
    if ("v7" in device_kind) or ("7x" in device_kind):
        try:
            dice_blk = _run(pltpu.CORE_PARALLEL)
        except Exception:
            dice_blk = _run(pltpu.PARALLEL)
    else:
        dice_blk = _run(pltpu.PARALLEL)

    # Tiny O(N*C) scalar tail in the wrapper (matches PyTorch, including the possible
    # NaN when dice_n > 1 - 1e-5 makes the log argument exceed 1).
    dice_nc = dice_blk[:, 0, 0].reshape(N, C)
    dice_n = jnp.mean(dice_nc, axis=1)
    per_batch = jnp.power(-jnp.log(dice_n + 1e-5), 0.3)
    return jnp.clip(jnp.mean(per_batch), 0.0, 2.0)


def _reference_eldice_loss(pred, target):
    smooth = 1.0
    N, C = pred.shape[0], pred.shape[1]
    p = pred.reshape(N, C, -1).astype(jnp.float32)
    t = target.reshape(N, C, -1).astype(jnp.float32)
    inter = jnp.sum(p * t, axis=-1)
    p2 = jnp.sum(p * p, axis=-1)
    t2 = jnp.sum(t * t, axis=-1)
    dice = jnp.mean(2.0 * inter / (p2 + t2 + smooth), axis=1)
    return jnp.clip(jnp.mean(jnp.power(-jnp.log(dice + 1e-5), 0.3)), 0.0, 2.0)


if __name__ == "__main__":
    key = jax.random.PRNGKey(0)
    k1, k2 = jax.random.split(key)

    N, C, D, H, W = 2, 4, 4, 16, 16
    pred = jax.nn.sigmoid(jax.random.normal(k1, (N, C, D, H, W), dtype=jnp.float32))
    target = (jax.random.uniform(k2, (N, C, D, H, W)) > 0.5).astype(jnp.float32)

    loss = jax.block_until_ready(eldice_loss(pred, target))
    ref = jax.block_until_ready(_reference_eldice_loss(pred, target))
    np.testing.assert_allclose(np.asarray(loss), np.asarray(ref), rtol=1e-5, atol=1e-6)

    print("KERNEL_OK")
</pallas_src>

<mosaic_0001>
module attributes {stable_mosaic.version = 11 : i64} {
  func.func @kernel(%arg0: i32, %arg1: i32, %arg2: memref<1x8x128xf32, #tpu.memory_space<vmem>>, %arg3: memref<1x8x128xf32, #tpu.memory_space<vmem>>, %arg4: memref<1x1x128xf32, #tpu.memory_space<vmem>>, %arg5: memref<8x128xf32, #tpu.memory_space<vmem>>, %arg6: memref<8x128xf32, #tpu.memory_space<vmem>>, %arg7: memref<8x128xf32, #tpu.memory_space<vmem>>) attributes {dimension_semantics = [#tpu.dimension_semantics<parallel>, #tpu.dimension_semantics<arbitrary>], iteration_bounds = array<i64: 8, 1>, scalar_prefetch = 0 : i64, scratch_operands = 3 : i64, tpu.core_type = #tpu.core_type<tc>, window_params = [{transform_indices = @transform_0, window_bounds = array<i64: 1, 8, 128>}, {transform_indices = @transform_1, window_bounds = array<i64: 1, 8, 128>}, {transform_indices = @transform_2, window_bounds = array<i64: 1, 1, 128>}]} {
    %c0_i32 = arith.constant 0 : i32
    %0 = arith.cmpi eq, %arg1, %c0_i32 : i32
    %1 = arith.extui %0 : i1 to i32
    %c0_i32_0 = arith.constant 0 : i32
    %2 = arith.cmpi ne, %1, %c0_i32_0 : i32
    scf.if %2 {
      %cst_22 = arith.constant 0.000000e+00 : f32
      %23 = vector.broadcast %cst_22 : f32 to vector<8x128xf32>
      %c0_23 = arith.constant 0 : index
      %c0_24 = arith.constant 0 : index
      %24 = vector.load %arg5[%c0_23, %c0_24] : memref<8x128xf32, #tpu.memory_space<vmem>>, vector<8x128xf32>
      tpu.vector_store %arg5[%c0_23, %c0_24], %23 {strides = array<i32>} : memref<8x128xf32, #tpu.memory_space<vmem>>, vector<8x128xf32>,
      %cst_25 = arith.constant 0.000000e+00 : f32
      %25 = vector.broadcast %cst_25 : f32 to vector<8x128xf32>
      %c0_26 = arith.constant 0 : index
      %c0_27 = arith.constant 0 : index
      %26 = vector.load %arg6[%c0_26, %c0_27] : memref<8x128xf32, #tpu.memory_space<vmem>>, vector<8x128xf32>
      tpu.vector_store %arg6[%c0_26, %c0_27], %25 {strides = array<i32>} : memref<8x128xf32, #tpu.memory_space<vmem>>, vector<8x128xf32>,
      %cst_28 = arith.constant 0.000000e+00 : f32
      %27 = vector.broadcast %cst_28 : f32 to vector<8x128xf32>
      %c0_29 = arith.constant 0 : index
      %c0_30 = arith.constant 0 : index
      %28 = vector.load %arg7[%c0_29, %c0_30] : memref<8x128xf32, #tpu.memory_space<vmem>>, vector<8x128xf32>
      tpu.vector_store %arg7[%c0_29, %c0_30], %27 {strides = array<i32>} : memref<8x128xf32, #tpu.memory_space<vmem>>, vector<8x128xf32>,
    } else {
    }
    %c0 = arith.constant 0 : index
    %c0_1 = arith.constant 0 : index
    %c0_2 = arith.constant 0 : index
    %3 = vector.load %arg2[%c0, %c0_1, %c0_2] : memref<1x8x128xf32, #tpu.memory_space<vmem>>, vector<1x8x128xf32>
    %c0_3 = arith.constant 0 : index
    %c0_4 = arith.constant 0 : index
    %c0_5 = arith.constant 0 : index
    %4 = vector.load %arg3[%c0_3, %c0_4, %c0_5] : memref<1x8x128xf32, #tpu.memory_space<vmem>>, vector<1x8x128xf32>
    %c0_6 = arith.constant 0 : index
    %c0_7 = arith.constant 0 : index
    %5 = vector.load %arg5[%c0_6, %c0_7] : memref<8x128xf32, #tpu.memory_space<vmem>>, vector<8x128xf32>
    %6 = arith.mulf %3, %4 : vector<1x8x128xf32>
    %cst = arith.constant dense<0.000000e+00> : vector<8x128xf32>
    %7 = vector.multi_reduction <add>, %6, %cst [0] : vector<1x8x128xf32> to vector<8x128xf32>
    %8 = arith.addf %5, %7 : vector<8x128xf32>
    %c0_8 = arith.constant 0 : index
    %c0_9 = arith.constant 0 : index
    %9 = vector.load %arg5[%c0_8, %c0_9] : memref<8x128xf32, #tpu.memory_space<vmem>>, vector<8x128xf32>
    tpu.vector_store %arg5[%c0_8, %c0_9], %8 {strides = array<i32>} : memref<8x128xf32, #tpu.memory_space<vmem>>, vector<8x128xf32>,
    %c0_10 = arith.constant 0 : index
    %c0_11 = arith.constant 0 : index
    %10 = vector.load %arg6[%c0_10, %c0_11] : memref<8x128xf32, #tpu.memory_space<vmem>>, vector<8x128xf32>
    %11 = arith.mulf %3, %3 : vector<1x8x128xf32>
    %cst_12 = arith.constant dense<0.000000e+00> : vector<8x128xf32>
    %12 = vector.multi_reduction <add>, %11, %cst_12 [0] : vector<1x8x128xf32> to vector<8x128xf32>
    %13 = arith.addf %10, %12 : vector<8x128xf32>
    %c0_13 = arith.constant 0 : index
    %c0_14 = arith.constant 0 : index
    %14 = vector.load %arg6[%c0_13, %c0_14] : memref<8x128xf32, #tpu.memory_space<vmem>>, vector<8x128xf32>
    tpu.vector_store %arg6[%c0_13, %c0_14], %13 {strides = array<i32>} : memref<8x128xf32, #tpu.memory_space<vmem>>, vector<8x128xf32>,
    %c0_15 = arith.constant 0 : index
    %c0_16 = arith.constant 0 : index
    %15 = vector.load %arg7[%c0_15, %c0_16] : memref<8x128xf32, #tpu.memory_space<vmem>>, vector<8x128xf32>
    %16 = arith.mulf %4, %4 : vector<1x8x128xf32>
    %cst_17 = arith.constant dense<0.000000e+00> : vector<8x128xf32>
    %17 = vector.multi_reduction <add>, %16, %cst_17 [0] : vector<1x8x128xf32> to vector<8x128xf32>
    %18 = arith.addf %15, %17 : vector<8x128xf32>
    %c0_18 = arith.constant 0 : index
    %c0_19 = arith.constant 0 : index
    %19 = vector.load %arg7[%c0_18, %c0_19] : memref<8x128xf32, #tpu.memory_space<vmem>>, vector<8x128xf32>
    tpu.vector_store %arg7[%c0_18, %c0_19], %18 {strides = array<i32>} : memref<8x128xf32, #tpu.memory_space<vmem>>, vector<8x128xf32>,
    %c0_i32_20 = arith.constant 0 : i32
    %20 = arith.cmpi eq, %arg1, %c0_i32_20 : i32
    %21 = arith.extui %20 : i1 to i32
    %c0_i32_21 = arith.constant 0 : i32
    %22 = arith.cmpi ne, %21, %c0_i32_21 : i32
    scf.if %22 {
      %c0_22 = arith.constant 0 : index
      %c0_23 = arith.constant 0 : index
      %23 = vector.load %arg5[%c0_22, %c0_23] : memref<8x128xf32, #tpu.memory_space<vmem>>, vector<8x128xf32>
      %24 = vector.shape_cast %23 : vector<8x128xf32> to vector<1x8x128xf32>
      %cst_24 = arith.constant dense<0.000000e+00> : vector<1xf32>
      %25 = vector.multi_reduction <add>, %24, %cst_24 [1, 2] : vector<1x8x128xf32> to vector<1xf32>
      %26 = vector.shape_cast %25 : vector<1xf32> to vector<1x1x1xf32>
      %27 = vector.extract %26[0, 0, 0] : f32 from vector<1x1x1xf32>
      %c0_25 = arith.constant 0 : index
      %c0_26 = arith.constant 0 : index
      %28 = vector.load %arg6[%c0_25, %c0_26] : memref<8x128xf32, #tpu.memory_space<vmem>>, vector<8x128xf32>
      %29 = vector.shape_cast %28 : vector<8x128xf32> to vector<1x8x128xf32>
      %cst_27 = arith.constant dense<0.000000e+00> : vector<1xf32>
      %30 = vector.multi_reduction <add>, %29, %cst_27 [1, 2] : vector<1x8x128xf32> to vector<1xf32>
      %31 = vector.shape_cast %30 : vector<1xf32> to vector<1x1x1xf32>
      %32 = vector.extract %31[0, 0, 0] : f32 from vector<1x1x1xf32>
      %c0_28 = arith.constant 0 : index
      %c0_29 = arith.constant 0 : index
      %33 = vector.load %arg7[%c0_28, %c0_29] : memref<8x128xf32, #tpu.memory_space<vmem>>, vector<8x128xf32>
      %34 = vector.shape_cast %33 : vector<8x128xf32> to vector<1x8x128xf32>
      %cst_30 = arith.constant dense<0.000000e+00> : vector<1xf32>
      %35 = vector.multi_reduction <add>, %34, %cst_30 [1, 2] : vector<1x8x128xf32> to vector<1xf32>
      %36 = vector.shape_cast %35 : vector<1xf32> to vector<1x1x1xf32>
      %37 = vector.extract %36[0, 0, 0] : f32 from vector<1x1x1xf32>
      %cst_31 = arith.constant 2.000000e+00 : f32
      %38 = arith.mulf %cst_31, %27 : f32
      %39 = arith.addf %32, %37 : f32
      %cst_32 = arith.constant 1.000000e+00 : f32
      %40 = arith.addf %39, %cst_32 : f32
      %41 = arith.divf %38, %40 : f32
      %42 = vector.broadcast %41 : f32 to vector<1x1x128xf32>
      %c0_33 = arith.constant 0 : index
      %c0_34 = arith.constant 0 : index
      %c0_35 = arith.constant 0 : index
      %43 = vector.load %arg4[%c0_33, %c0_34, %c0_35] : memref<1x1x128xf32, #tpu.memory_space<vmem>>, vector<1x1x128xf32>
      tpu.vector_store %arg4[%c0_33, %c0_34, %c0_35], %42 {strides = array<i32>} : memref<1x1x128xf32, #tpu.memory_space<vmem>>, vector<1x1x128xf32>,
    } else {
    }
    return
  }
  func.func @transform_0(%arg0: i32, %arg1: i32) -> (i32, i32, i32) {
    %c0_i32 = arith.constant 0 : i32
    %c0_i32_0 = arith.constant 0 : i32
    return %arg0, %arg1, %c0_i32 : i32, i32, i32
  }
  func.func @transform_1(%arg0: i32, %arg1: i32) -> (i32, i32, i32) {
    %c0_i32 = arith.constant 0 : i32
    %c0_i32_0 = arith.constant 0 : i32
    return %arg0, %arg1, %c0_i32 : i32, i32, i32
  }
  func.func @transform_2(%arg0: i32, %arg1: i32) -> (i32, i32, i32) {
    %c0_i32 = arith.constant 0 : i32
    %c0_i32_0 = arith.constant 0 : i32
    %c0_i32_1 = arith.constant 0 : i32
    return %arg0, %c0_i32, %c0_i32_0 : i32, i32, i32
  }
}

</mosaic_0001>

<llo_original>
// kernel: tpu_custom_call.1
$region0: #{tpu_custom_call.1}
  #allocation0 [shape = 'u32[]', space=smem, size = 0x4, offset = 0x4, fixed_abs, tag = 'smem constant byte address 0x4 - core index']
  #allocation1 [shape = 'u32[72,128]{1,0:T(1,128)}', space=vmem, size = 0x9000, scoped, tag = 'internal scratch']
  #allocation2 [shape = 'f32[8,128]{1,0:T(8,128)}', space=vmem, size = 0x1000, scoped, tag = 'scratch operand']
  #allocation3 [shape = 'f32[8,128]{1,0:T(8,128)}', space=vmem, size = 0x1000, scoped, tag = 'scratch operand']
  #allocation4 [shape = 'f32[8,128]{1,0:T(8,128)}', space=vmem, size = 0x1000, scoped, tag = 'scratch operand']
  %s0 = inlined_call_operand.hbm [shape: f32[8,8,128], index: 0, kind: input, shape index: {}]
  %s1 = inlined_call_operand.hbm [shape: f32[8,8,128], index: 1, kind: input, shape index: {}]
  %s2 = inlined_call_operand.hbm [shape: f32[8,1,128], index: 2, kind: output, shape index: {}]
  %s3 = sld [smem:[#allocation0]]
  $region57: #{tpu_custom_call.1} parent=0
    _
  %s5 = ssub.s32 1, %s3
  %s6 = scalar_select 0, %s5, %s3
  $region1: #{tpu_custom_call.1} parent=0
    #allocation5 [shape = 'u8[8192]{0}', space=vmem, size = 0x2000, scoped, tag = 'input window, operand 0']
    #allocation6 [shape = 's32[2]{0}', space=sflag, size = 0x8, scoped, tag = 'scoped memory for tpu_custom_call.1']
    #allocation7 [shape = 's32[2]{0}', space=sflag, size = 0x8, scoped, tag = 'scoped memory for tpu_custom_call.1']
    #allocation8 [shape = 'u8[8192]{0}', space=vmem, size = 0x2000, scoped, tag = 'input window, operand 1']
    #allocation9 [shape = 's32[2]{0}', space=sflag, size = 0x8, scoped, tag = 'scoped memory for tpu_custom_call.1']
    #allocation10 [shape = 'u8[1024]{0}', space=vmem, size = 0x400, scoped, tag = 'output window, operand 0']
    %7 = vsyncpa [#allocation6], 0
    %s8 = scalar_lea.sflag [#allocation6], 1
    %9 = vsyncpa %s8, 0
    %10 = vsyncpa [#allocation9], 0
    %s11 = scalar_lea.sflag [#allocation9], 1
    %12 = vsyncpa %s11, 0
    %13 = vsyncpa [#allocation7], 0
    %s14 = scalar_lea.sflag [#allocation7], 1
    %15 = vsyncpa %s14, 0
    loop: start=0, step=1, limit=10
    $region2: #{tpu_custom_call.1} parent=1 // loop_pre_header
      _
    $region3: #{tpu_custom_call.1} parent=1 // loop_header
      %s17 = sphi 0, %s21
      %p18 = scmp.ge.s32.totalorder %s17, 10
      %s24 = sphi 0, %s36
      %s25 = sphi 0, %s32
      %s26 = sphi 0, %s24
      %s27 = sphi 0, %s25
      %s28 = sphi 0, %s26
      %s29 = sphi 0, %s27
      %s41 = sphi 0, %s43
      %s44 = sphi 0, %s41
      %s45 = sphi 0, %s44
      %s61 = sphi 0, %s45
      %s69 = sphi 0, %s71
      %s72 = sphi 0, %s69
      %s73 = sphi 0, %s72
      %s89 = sphi 0, %s73
      %s95 = sphi 0, %s97
      %s98 = sphi 0, %s95
      %s99 = sphi 0, %s98
      %s115 = sphi 0, %s99
    $region4: #{tpu_custom_call.1} parent=1 // loop_header_branch
      %20 = sbr.rel (%p18) target = $region8
    $region5: #{tpu_custom_call.1} parent=1 // loop_body
      %s22 = ssub.s32 %s17, 1
      %s23 = ssub.s32 %s17, 2
      %s30 = sadd.s32 1, %s25
      %p31 = scmp.ge.s32.totalorder %s30, 1
      %s32 = scalar_select %p31, 0, %s30
      %s33 = sadd.s32 1, %s24
      %s34 = scalar_select %p31, %s33, %s24
      %p35 = scmp.ge.s32.totalorder %s34, 8
      %s36 = scalar_select %p35, 0, %s34
      %s37 = ssub.s32 %s24, %s36
      %s38 = ssub.s32 %s25, %s32
      %s39 = sor.u32 %s37, %s38
      %p40 = scmp.eq.s32.totalorder %s39, 0
      %s42 = sadd.s32 %s41, 1
      %s43 = scalar_select %p40, %s41, %s42
      %p46 = pneg %p40
      %p47 = scmp.eq.s32.totalorder %s17, 7
      %p48 = por %p46, %p47
      %p49 = scmp.ne.s32.totalorder %s41, %s44
      %p50 = scmp.eq.s32.totalorder %s17, 0
      %p51 = por %p49, %p50
      %p52 = scmp.ne.s32.totalorder %s41, %s44
      %p53 = scmp.eq.s32.totalorder %s22, 7
      %p54 = por %p52, %p53
      %p55 = scmp.ne.s32.totalorder %s44, %s45
      %p56 = scmp.eq.s32.totalorder %s22, 0
      %p57 = por %p55, %p56
      %p58 = scmp.ne.s32.totalorder %s44, %s45
      %p59 = scmp.eq.s32.totalorder %s23, 7
      %p60 = por %p58, %p59
      %p62 = scmp.ne.s32.totalorder %s45, %s61
      %p63 = scmp.eq.s32.totalorder %s23, 0
      %p64 = por %p62, %p63
      %s65 = ssub.s32 %s24, %s36
      %s66 = ssub.s32 %s25, %s32
      %s67 = sor.u32 %s65, %s66
      %p68 = scmp.eq.s32.totalorder %s67, 0
      %s70 = sadd.s32 %s69, 1
      %s71 = scalar_select %p68, %s69, %s70
      %p74 = pneg %p68
      %p75 = scmp.eq.s32.totalorder %s17, 7
      %p76 = por %p74, %p75
      %p77 = scmp.ne.s32.totalorder %s69, %s72
      %p78 = scmp.eq.s32.totalorder %s17, 0
      %p79 = por %p77, %p78
      %p80 = scmp.ne.s32.totalorder %s69, %s72
      %p81 = scmp.eq.s32.totalorder %s22, 7
      %p82 = por %p80, %p81
      %p83 = scmp.ne.s32.totalorder %s72, %s73
      %p84 = scmp.eq.s32.totalorder %s22, 0
      %p85 = por %p83, %p84
      %p86 = scmp.ne.s32.totalorder %s72, %s73
      %p87 = scmp.eq.s32.totalorder %s23, 7
      %p88 = por %p86, %p87
      %p90 = scmp.ne.s32.totalorder %s73, %s89
      %p91 = scmp.eq.s32.totalorder %s23, 0
      %p92 = por %p90, %p91
      %s93 = ssub.s32 %s24, %s36
      %p94 = scmp.eq.s32.totalorder %s93, 0
      %s96 = sadd.s32 %s95, 1
      %s97 = scalar_select %p94, %s95, %s96
      %p100 = pneg %p94
      %p101 = scmp.eq.s32.totalorder %s17, 7
      %p102 = por %p100, %p101
      %p103 = scmp.ne.s32.totalorder %s95, %s98
      %p104 = scmp.eq.s32.totalorder %s17, 0
      %p105 = por %p103, %p104
      %p106 = scmp.ne.s32.totalorder %s95, %s98
      %p107 = scmp.eq.s32.totalorder %s22, 7
      %p108 = por %p106, %p107
      %p109 = scmp.ne.s32.totalorder %s98, %s99
      %p110 = scmp.eq.s32.totalorder %s22, 0
      %p111 = por %p109, %p110
      %p112 = scmp.ne.s32.totalorder %s98, %s99
      %p113 = scmp.eq.s32.totalorder %s23, 7
      %p114 = por %p112, %p113
      %p116 = scmp.ne.s32.totalorder %s99, %s115
      %p117 = scmp.eq.s32.totalorder %s23, 0
      %p118 = por %p116, %p117
      %p119 = scmp.le.s32.totalorder 1, %s17
      %p120 = scmp.lt.s32.totalorder %s17, 9
      %p121 = pnand %p119, %p120
      %p122 = pneg %p121
      // Predicated region
      $region9: #{tpu_custom_call.1} parent=5 // pred_check
        _
      $region10: #{tpu_custom_call.1} parent=5 // pred_check_branch
        %124 = sbr.rel (%p121) target = $region12
      $region11: #{tpu_custom_call.1} parent=5 // pred_region
        %s125 = ssub.s32 %s17, 1
      $region12: #{tpu_custom_call.1} parent=5 // pred_fallthru
        _
      %p126 = scmp.lt.s32.totalorder %s17, 8
      // Predicated region
      $region13: #{tpu_custom_call.1} parent=5 // pred_check
        %p127 = pneg %p126
      $region14: #{tpu_custom_call.1} parent=5 // pred_check_branch
        %129 = sbr.rel (%p127) target = $region16
      $region15: #{tpu_custom_call.1} parent=5 // pred_region
        // Predicated region
        $region17: #{tpu_custom_call.1} parent=15 // pred_check
          %p130 = pneg %p51
        $region18: #{tpu_custom_call.1} parent=15 // pred_check_branch
          %132 = sbr.rel (%p130) target = $region20
        $region19: #{tpu_custom_call.1} parent=15 // pred_region
          %s133 = sand.u32 %s41, 1
          %s134 = scalar_lea.sflag [#allocation6], %s133
          %s135 = sand.u32 %s41, 1
          %s136 = smul.addr %s135, 8
          %s137 = scalar_lea.vmem [#allocation5], %s136
          %139 = vsyncadd %s134, 0
          %s140 = sadd.s32 %s25, %s24
          %s141 = smul.addr %s140, 8
          %s142 = scalar_lea.hbm %s0, %s141
          %s144 = sshll.u32 %s142, 4
          %s145 = int_to_ptr.hbm [resolvable:$true] %s144
          %s146 = sshll.u32 %s137, 4
          %s147 = int_to_ptr.vmem [resolvable:$true] %s146
          %149 = dma.hbm_to_vmem [thread:$0]  %s145, 128, %s147, %s134
        $region20: #{tpu_custom_call.1} parent=15 // pred_fallthru
          _
        // Predicated region
        $region21: #{tpu_custom_call.1} parent=15 // pred_check
          %p150 = pneg %p79
        $region22: #{tpu_custom_call.1} parent=15 // pred_check_branch
          %152 = sbr.rel (%p150) target = $region24
        $region23: #{tpu_custom_call.1} parent=15 // pred_region
          %s153 = sand.u32 %s69, 1
          %s154 = scalar_lea.sflag [#allocation9], %s153
          %s155 = sand.u32 %s69, 1
          %s156 = smul.addr %s155, 8
          %s157 = scalar_lea.vmem [#allocation8], %s156
          %159 = vsyncadd %s154, 0
          %s160 = sadd.s32 %s25, %s24
          %s161 = smul.addr %s160, 8
          %s162 = scalar_lea.hbm %s1, %s161
          %s164 = sshll.u32 %s162, 4
          %s165 = int_to_ptr.hbm [resolvable:$true] %s164
          %s166 = sshll.u32 %s157, 4
          %s167 = int_to_ptr.vmem [resolvable:$true] %s166
          %169 = dma.hbm_to_vmem [thread:$0]  %s165, 128, %s167, %s154
        $region24: #{tpu_custom_call.1} parent=15 // pred_fallthru
          _
      $region16: #{tpu_custom_call.1} parent=5 // pred_fallthru
        _
      %p170 = scmp.le.s32.totalorder 1, %s17
      %p171 = scmp.lt.s32.totalorder %s17, 9
      %p172 = pnand %p170, %p171
      %p173 = pneg %p172
      // Predicated region
      $region25: #{tpu_custom_call.1} parent=5 // pred_check
        _
      $region26: #{tpu_custom_call.1} parent=5 // pred_check_branch
        %175 = sbr.rel (%p172) target = $region28
      $region27: #{tpu_custom_call.1} parent=5 // pred_region
        %s176 = ssub.s32 %s17, 1
        %s177 = sand.u32 %s44, 1
        %s178 = scalar_lea.sflag [#allocation6], %s177
        %s179 = sand.u32 %s44, 1
        %s180 = smul.addr %s179, 8
        %s181 = scalar_lea.vmem [#allocation5], %s180
        // Predicated region
        $region29: #{tpu_custom_call.1} parent=27 // pred_check
          %p182 = pneg %p57
        $region30: #{tpu_custom_call.1} parent=27 // pred_check_branch
          %184 = sbr.rel (%p182) target = $region32
        $region31: #{tpu_custom_call.1} parent=27 // pred_region
          %186 = dma.done %s178, 128
        $region32: #{tpu_custom_call.1} parent=27 // pred_fallthru
          _
        %s187 = sand.u32 %s72, 1
        %s188 = scalar_lea.sflag [#allocation9], %s187
        %s189 = sand.u32 %s72, 1
        %s190 = smul.addr %s189, 8
        %s191 = scalar_lea.vmem [#allocation8], %s190
        // Predicated region
        $region33: #{tpu_custom_call.1} parent=27 // pred_check
          %p192 = pneg %p85
        $region34: #{tpu_custom_call.1} parent=27 // pred_check_branch
          %194 = sbr.rel (%p192) target = $region36
        $region35: #{tpu_custom_call.1} parent=27 // pred_region
          %196 = dma.done %s188, 128
        $region36: #{tpu_custom_call.1} parent=27 // pred_fallthru
          _
        %s197 = sand.u32 %s44, 1
        %s198 = scalar_lea.sflag [#allocation6], %s197
        %s199 = sand.u32 %s44, 1
        %s200 = smul.addr %s199, 8
        %s201 = scalar_lea.vmem [#allocation5], %s200
        %p202 = pneg %p57
        %p203 = pneg %p54
        %s204 = sand.u32 %s72, 1
        %s205 = scalar_lea.sflag [#allocation9], %s204
        %s206 = sand.u32 %s72, 1
        %s207 = smul.addr %s206, 8
        %s208 = scalar_lea.vmem [#allocation8], %s207
        %p209 = pneg %p85
        %p210 = pneg %p82
        %p211 = pneg %p111
        %p212 = pneg %p108
        %s213 = sand.u32 %s98, 1
        %s214 = scalar_lea.sflag [#allocation7], %s213
        %s215 = sand.u32 %s98, 1
        %s216 = scalar_lea.vmem [#allocation10], %s215
        %p217 = scmp.eq.s32.totalorder %s27, 0
        // Predicated region
        $region37: #{tpu_custom_call.1} parent=27 // pred_check
          %p218 = pneg %p217
        $region38: #{tpu_custom_call.1} parent=27 // pred_check_branch
          %220 = sbr.rel (%p218) target = $region40
        $region39: #{tpu_custom_call.1} parent=27 // pred_region
          %221 = vst [vmem:[#allocation2] sm:$0xff] 0.0
          %222 = vst [vmem:[#allocation3] sm:$0xff] 0.0
          %223 = vst [vmem:[#allocation4] sm:$0xff] 0.0
        $region40: #{tpu_custom_call.1} parent=27 // pred_fallthru
          _
        %v224 = vld [vmem:[%s181] sm:$0xff]
        %v225 = vld [vmem:[%s191] sm:$0xff]
        %v226 = vld [vmem:[#allocation2] sm:$0xff]
        %v227 = vmul.f32 %v224, %v225
        %v228 = vadd.f32 %v227, 0.0
        %v229 = vadd.f32 %v226, %v228
        %230 = vst [vmem:[#allocation2] sm:$0xff] %v229
        %v231 = vld [vmem:[#allocation3] sm:$0xff]
        %v232 = vmul.f32 %v224, %v224
        %v233 = vadd.f32 %v232, 0.0
        %v234 = vadd.f32 %v231, %v233
        %235 = vst [vmem:[#allocation3] sm:$0xff] %v234
        %v236 = vld [vmem:[#allocation4] sm:$0xff]
        %v237 = vmul.f32 %v225, %v225
        %v238 = vadd.f32 %v237, 0.0
        %v239 = vadd.f32 %v236, %v238
        %240 = vst [vmem:[#allocation4] sm:$0xff] %v239
        // Predicated region
        $region41: #{tpu_custom_call.1} parent=27 // pred_check
          %p241 = pneg %p217
        $region42: #{tpu_custom_call.1} parent=27 // pred_check_branch
          %243 = sbr.rel (%p241) target = $region44
        $region43: #{tpu_custom_call.1} parent=27 // pred_region
          %v244 = vld [vmem:[#allocation2] sm:$0xff]
          %245 = vadd.xlane.f32.xlu0 %v244
          %v246 = vpop.xlane.xlu0 %245
          %v247 = vrot.slane %v246, 4
          %v248 = vadd.f32 %v246, %v247
          %v249 = vrot.slane %v248, 2
          %v250 = vadd.f32 %v248, %v249
          %v251 = vrot.slane %v250, 1
          %v252 = vadd.f32 %v250, %v251
          %s253 = vtos %v252
          %v254 = vld [vmem:[#allocation3] sm:$0xff]
          %255 = vadd.xlane.f32.xlu0 %v254
          %v256 = vpop.xlane.xlu0 %255
          %v257 = vrot.slane %v256, 4
          %v258 = vadd.f32 %v256, %v257
          %v259 = vrot.slane %v258, 2
          %v260 = vadd.f32 %v258, %v259
          %v261 = vrot.slane %v260, 1
          %v262 = vadd.f32 %v260, %v261
          %s263 = vtos %v262
          %v264 = vld [vmem:[#allocation4] sm:$0xff]
          %265 = vadd.xlane.f32.xlu0 %v264
          %v266 = vpop.xlane.xlu0 %265
          %v267 = vrot.slane %v266, 4
          %v268 = vadd.f32 %v266, %v267
          %v269 = vrot.slane %v268, 2
          %v270 = vadd.f32 %v268, %v269
          %v271 = vrot.slane %v270, 1
          %v272 = vadd.f32 %v270, %v271
          %s273 = vtos %v272
          %s274 = smul.f32 %s253, 2.0
          %s275 = sadd.f32 %s263, %s273
          %s276 = sadd.f32 %s275, 1.0
          %v277 = vstv %s276
          %v278 = vrcp.pop %v277
          %v279 = vmul.f32 %v277, %v278
          %v280 = vsub.f32 1.0, %v279
          %v281 = vmul.f32 %v278, %v280
          %v282 = vadd.f32 %v278, %v281
          %vm283 = vweird.f32 %v277
          %vm284 = vweird.f32 %v278
          %vm285 = vmor %vm283, %vm284
          %v286 = vsel %vm285, %v278, %v282
          %v287 = vand.u32 2147483647, %v277
          %vm288 = vcmp.eq.f32.partialorder %v287, 8.507059e+37
          %v289 = vand.u32 %v277, 2147483648
          %v290 = vor.u32 1.1754944e-38, %v289
          %v291 = vsel %vm288, %v290, %v286
          %s292 = vtos %v291
          %s293 = smul.f32 %s274, %s292
          %v294 = vstv %s293
          %295 = vst [vmem:[%s216] sm:$0x1] %v294
        $region44: #{tpu_custom_call.1} parent=27 // pred_fallthru
          _
        %s296 = sand.u32 %s98, 1
        %s297 = scalar_lea.sflag [#allocation7], %s296
        %s298 = sand.u32 %s98, 1
        %s299 = scalar_lea.vmem [#allocation10], %s298
        // Predicated region
        $region45: #{tpu_custom_call.1} parent=27 // pred_check
          %p300 = pneg %p108
        $region46: #{tpu_custom_call.1} parent=27 // pred_check_branch
          %302 = sbr.rel (%p300) target = $region48
        $region47: #{tpu_custom_call.1} parent=27 // pred_region
          %304 = vsyncadd %s297, 0
          %s305 = scalar_lea.hbm %s2, %s26
          %s307 = sshll.u32 %s299, 4
          %s308 = int_to_ptr.vmem [resolvable:$true] %s307
          %s309 = sshll.u32 %s305, 4
          %s310 = int_to_ptr.hbm [resolvable:$true] %s309
          %312 = dma.vmem_to_hbm [thread:$0]  %s308, 16, %s310, %s297
        $region48: #{tpu_custom_call.1} parent=27 // pred_fallthru
          _
      $region28: #{tpu_custom_call.1} parent=5 // pred_fallthru
        _
      %p313 = scmp.le.s32.totalorder 2, %s17
      // Predicated region
      $region49: #{tpu_custom_call.1} parent=5 // pred_check
        %p314 = pneg %p313
      $region50: #{tpu_custom_call.1} parent=5 // pred_check_branch
        %316 = sbr.rel (%p314) target = $region52
      $region51: #{tpu_custom_call.1} parent=5 // pred_region
        %s317 = ssub.s32 %s17, 2
        // Predicated region
        $region53: #{tpu_custom_call.1} parent=51 // pred_check
          %p318 = pneg %p114
        $region54: #{tpu_custom_call.1} parent=51 // pred_check_branch
          %320 = sbr.rel (%p318) target = $region56
        $region55: #{tpu_custom_call.1} parent=51 // pred_region
          %s321 = sand.u32 %s99, 1
          %s322 = scalar_lea.sflag [#allocation7], %s321
          %s323 = sand.u32 %s99, 1
          %s324 = scalar_lea.vmem [#allocation10], %s323
          %326 = dma.done %s322, 16
        $region56: #{tpu_custom_call.1} parent=51 // pred_fallthru
          _
      $region52: #{tpu_custom_call.1} parent=5 // pred_fallthru
        _
    $region6: #{tpu_custom_call.1} parent=1 // loop_footer
      %s21 = sadd.s32 1, %s17
    $region7: #{tpu_custom_call.1} parent=1 // loop_footer_branch
      %16 = sbr.rel target = $region3
    $region8: #{tpu_custom_call.1} parent=1 // loop_exit
      _
    %327 = vsyncpa [#allocation6], 1
    %s328 = scalar_lea.sflag [#allocation6], 1
    %329 = vsyncpa %s328, 1
    %330 = vsyncpa [#allocation9], 1
    %s331 = scalar_lea.sflag [#allocation9], 1
    %332 = vsyncpa %s331, 1
    %333 = vsyncpa [#allocation7], 1
    %s334 = scalar_lea.sflag [#allocation7], 1
    %335 = vsyncpa %s334, 1

</llo_original>
